<compile_context>
chip_gen: v5e
topology: v5e:2x2
jax: 0.10.0
libtpu: 0.0.40
codegen_flags: <defaults>
</compile_context>

<pallas_src>
import functools

import numpy as np
import jax
import jax.numpy as jnp
from jax.experimental import pallas as pl
from jax.experimental.pallas import tpu as pltpu


# ----------------------------------------------------------------------------
# Small helpers
# ----------------------------------------------------------------------------

_VMEM_LIMIT = 32 * 1024 * 1024  # safe raise on v5e (16 MiB default), neutral elsewhere


def _round_up(x, m):
    return (x + m - 1) // m * m


def _largest_tile(n, cap):
    """Largest lane-friendly tile <= cap that divides n (falls back to n un-tiled)."""
    if n <= cap:
        return n
    for t in range(cap - cap % 128, 0, -128):
        if n % t == 0:
            return t
    return n


# ----------------------------------------------------------------------------
# Pallas kernels
# ----------------------------------------------------------------------------

def _linear_kernel(x_ref, w_ref, b_ref, o_ref, acc_ref):
    # Tiled matmul with f32 accumulator; bias added on the final K step.
    @pl.when(pl.program_id(2) == 0)
    def _():
        acc_ref[...] = jnp.zeros_like(acc_ref)

    acc_ref[...] += jnp.dot(x_ref[...], w_ref[...],
                            preferred_element_type=jnp.float32)

    @pl.when(pl.program_id(2) == pl.num_programs(2) - 1)
    def _():
        o_ref[...] = acc_ref[...] + b_ref[...]


def pallas_linear(x, w, b, *, tm=128, tn=256, tk=256):
    """(M,K)@(K,N)+b with bf16 operands, f32 accumulation, grid tiling + zero pad."""
    M, K = x.shape
    N = w.shape[1]
    tm = min(tm, _round_up(M, 8))
    tn = min(tn, _round_up(N, 128))
    tk = min(tk, _round_up(K, 128))
    Mp, Kp, Np = _round_up(M, tm), _round_up(K, tk), _round_up(N, tn)

    xp = jnp.pad(x.astype(jnp.bfloat16), ((0, Mp - M), (0, Kp - K)))
    wp = jnp.pad(w.astype(jnp.bfloat16), ((0, Kp - K), (0, Np - N)))
    bp = jnp.pad(b.reshape(1, N).astype(jnp.float32), ((0, 0), (0, Np - N)))

    out = pl.pallas_call(
        _linear_kernel,
        out_shape=jax.ShapeDtypeStruct((Mp, Np), jnp.float32),
        grid=(Mp // tm, Np // tn, Kp // tk),
        in_specs=[
            pl.BlockSpec((tm, tk), lambda i, j, k: (i, k)),
            pl.BlockSpec((tk, tn), lambda i, j, k: (k, j)),
            pl.BlockSpec((1, tn), lambda i, j, k: (0, j)),
        ],
        out_specs=pl.BlockSpec((tm, tn), lambda i, j, k: (i, j)),
        scratch_shapes=[pltpu.VMEM((tm, tn), jnp.float32)],
        compiler_params=pltpu.CompilerParams(
            dimension_semantics=("parallel", "parallel", "arbitrary"),
            vmem_limit_bytes=_VMEM_LIMIT),
    )(xp, wp, bp)
    return out[:M, :N]


def _decoder_kernel(tok_ref, emb_ref, pd_ref, o_ref, *, scale):
    # tokens (n_tok, C) bf16  @  (feature + PE + dense) (C, tv) bf16  ->  (n_tok, tv) f32
    feat = (emb_ref[...] + pd_ref[...]).astype(jnp.bfloat16)
    o_ref[...] = jnp.dot(tok_ref[...], feat,
                         preferred_element_type=jnp.float32) * scale


def pallas_decoder_scores(tokens, emb_cf, pd, scale, *, max_vox_tile=2048):
    """Batched mask-decoder reduction.

    tokens: (n_tok, C)      prompt tokens (all classes at once)
    emb_cf: (bs, C, n_vox)  channel-first image features
    pd:     (C, n_vox)      image_pe + dense prompt embedding (batch-broadcast)
    returns (bs, n_tok, n_vox) f32, lane-dense in n_vox.
    """
    n_tok, C = tokens.shape
    bs, _, n_vox = emb_cf.shape
    tv = _largest_tile(n_vox, max_vox_tile)
    kernel = functools.partial(_decoder_kernel, scale=scale)
    return pl.pallas_call(
        kernel,
        out_shape=jax.ShapeDtypeStruct((bs, n_tok, n_vox), jnp.float32),
        grid=(bs, n_vox // tv),
        in_specs=[
            pl.BlockSpec((n_tok, C), lambda b, j: (0, 0)),       # resident across grid
            pl.BlockSpec((None, C, tv), lambda b, j: (b, 0, j)),
            pl.BlockSpec((C, tv), lambda b, j: (0, j)),
        ],
        out_specs=pl.BlockSpec((None, n_tok, tv), lambda b, j: (b, 0, j)),
        compiler_params=pltpu.CompilerParams(
            dimension_semantics=("parallel", "parallel"),
            vmem_limit_bytes=_VMEM_LIMIT),
    )(tokens.astype(jnp.bfloat16), emb_cf.astype(jnp.float32), pd.astype(jnp.float32))


def _upsample_kernel(low_ref, wd_ref, whwT_ref, o_ref):
    # Separable trilinear interpolation as two matmuls:
    #   (Dout, Din) @ (Din, Hin*Win) @ (Hin*Win, tile_hw)
    # TODO(synk): on v5e the tiny-K depth matmul could be a 2-tap VPU weighted add.
    t = jnp.dot(wd_ref[...], low_ref[...], preferred_element_type=jnp.float32)
    o_ref[...] = jnp.dot(t, whwT_ref[...], preferred_element_type=jnp.float32)


def pallas_trilinear_upsample(low, wd, whwT, *, max_hw_tile=2048):
    """low (bs, Din, Hin*Win) -> (bs, Dout, Hout*Wout), align_corners=False trilinear."""
    bs, din, hw_in = low.shape
    dout = wd.shape[0]
    hw_out = whwT.shape[1]
    tile_hw = _largest_tile(hw_out, max_hw_tile)
    return pl.pallas_call(
        _upsample_kernel,
        out_shape=jax.ShapeDtypeStruct((bs, dout, hw_out), jnp.float32),
        grid=(bs, hw_out // tile_hw),
        in_specs=[
            pl.BlockSpec((None, din, hw_in), lambda b, j: (b, 0, 0)),
            pl.BlockSpec((dout, din), lambda b, j: (0, 0)),       # resident across grid
            pl.BlockSpec((hw_in, tile_hw), lambda b, j: (0, j)),
        ],
        out_specs=pl.BlockSpec((None, dout, tile_hw), lambda b, j: (b, 0, j)),
        compiler_params=pltpu.CompilerParams(
            dimension_semantics=("parallel", "parallel"),
            vmem_limit_bytes=_VMEM_LIMIT),
    )(low.astype(jnp.float32), wd, whwT)


def _upsample_argmax_kernel(low_ref, wd_ref, whwT_ref, o_ref, max_ref, arg_ref):
    # Fused per-class trilinear upsample + running argmax over the class axis.
    # argmax(softmax(x), axis=class) == argmax(x, axis=class); strict '>' keeps the
    # first (lowest) class index on ties, matching torch semantics.
    c = pl.program_id(2)
    t = jnp.dot(wd_ref[...], low_ref[...], preferred_element_type=jnp.float32)
    logit = jnp.dot(t, whwT_ref[...], preferred_element_type=jnp.float32)

    @pl.when(c == 0)
    def _():
        max_ref[...] = logit
        arg_ref[...] = jnp.zeros_like(arg_ref)

    @pl.when(c > 0)
    def _():
        upd = logit > max_ref[...]
        max_ref[...] = jnp.where(upd, logit, max_ref[...])
        arg_ref[...] = jnp.where(upd, c, arg_ref[...])

    @pl.when(c == pl.num_programs(2) - 1)
    def _():
        o_ref[...] = arg_ref[...]


def pallas_upsample_argmax(low_all, wd, whwT, *, max_hw_tile=2048):
    """low_all (bs, n_cls, Din, Hin*Win) -> (bs, Dout, Hout*Wout) int32 class argmax.

    The full-resolution per-class logits never hit HBM: the class axis is the
    innermost "arbitrary" grid axis with a VMEM running max / argmax scratch.
    """
    bs, n_cls, din, hw_in = low_all.shape
    dout = wd.shape[0]
    hw_out = whwT.shape[1]
    tile_hw = _largest_tile(hw_out, max_hw_tile)
    return pl.pallas_call(
        _upsample_argmax_kernel,
        out_shape=jax.ShapeDtypeStruct((bs, dout, hw_out), jnp.int32),
        grid=(bs, hw_out // tile_hw, n_cls),
        in_specs=[
            pl.BlockSpec((None, None, din, hw_in), lambda b, j, c: (b, c, 0, 0)),
            pl.BlockSpec((dout, din), lambda b, j, c: (0, 0)),       # resident
            pl.BlockSpec((hw_in, tile_hw), lambda b, j, c: (0, j)),  # resident over c
        ],
        out_specs=pl.BlockSpec((None, dout, tile_hw), lambda b, j, c: (b, 0, j)),
        scratch_shapes=[pltpu.VMEM((dout, tile_hw), jnp.float32),
                        pltpu.VMEM((dout, tile_hw), jnp.int32)],
        compiler_params=pltpu.CompilerParams(
            dimension_semantics=("parallel", "parallel", "arbitrary"),
            vmem_limit_bytes=_VMEM_LIMIT),
    )(low_all.astype(jnp.float32), wd, whwT)


# ----------------------------------------------------------------------------
# Glue helpers
# ----------------------------------------------------------------------------

def _linear_interp_matrix(s_in, s_out):
    """Row o holds the two weights F.interpolate(mode='trilinear',
    align_corners=False) would use for output index o along one axis."""
    w = np.zeros((s_out, s_in), np.float32)
    scale = s_in / s_out
    for o in range(s_out):
        src = (o + 0.5) * scale - 0.5
        src = max(src, 0.0)
        i0 = min(int(np.floor(src)), s_in - 1)
        i1 = min(i0 + 1, s_in - 1)
        lam = src - i0
        w[o, i0] += 1.0 - lam
        w[o, i1] += lam
    return w


PREDEFINED_CATEGORIES = [
    'liver', 'spleen', 'aorta', 'stomach', 'pancreas', 'right kidney',
    'left kidney', 'tumor', 'right lung', 'left lung', 'heart',
    'gallbladder', 'trachea',
]


class SegVolPallas:
    """Synthetic SegVol forward with Pallas kernels for all dense compute."""

    EMBED_DIM = 768      # image / prompt embedding dim (dim_align output)
    CLIP_DIM = 512       # CLIP pooler output dim (dim_align input)

    def __init__(self, roi_size, patch_size, test_mode=False):
        self.roi_size = tuple(int(r) for r in roi_size)
        self.patch_size = tuple(int(p) for p in patch_size)
        self.feat_shape = np.array(roi_size) / np.array(patch_size)
        self._feat = tuple(int(f) for f in self.feat_shape)
        self.test_mode = test_mode

        fd, fh, fw = self._feat
        n_patches = fd * fh * fw
        patch_dim = 1 * self.patch_size[0] * self.patch_size[1] * self.patch_size[2]

        keys = jax.random.split(jax.random.PRNGKey(0), 8)
        s = 0.02
        # image encoder (patch embedding + learned positional embedding)
        self.patch_w = jax.random.normal(keys[0], (patch_dim, self.EMBED_DIM), jnp.float32) * s
        self.patch_b = jnp.zeros((self.EMBED_DIM,), jnp.float32)
        self.pos_embed = jax.random.normal(keys[1], (n_patches, self.EMBED_DIM), jnp.float32) * s
        # text encoder dim_align: Linear(512, 768)
        self.align_w = jax.random.normal(keys[2], (self.CLIP_DIM, self.EMBED_DIM), jnp.float32) * s
        self.align_b = jax.random.normal(keys[3], (self.EMBED_DIM,), jnp.float32) * s
        # prompt encoder params
        self.no_mask_embed = jax.random.normal(keys[4], (self.EMBED_DIM,), jnp.float32) * s
        self.dense_pe = jax.random.normal(keys[5], (1, self.EMBED_DIM, fd, fh, fw), jnp.float32) * s
        # synthetic CLIP pooler outputs, one deterministic row per known organ name
        self.vocab = {name: i for i, name in enumerate(PREDEFINED_CATEGORIES)}
        self.text_table = jax.random.normal(keys[6], (len(PREDEFINED_CATEGORIES), self.CLIP_DIM),
                                            jnp.float32)
        # dim_align of the fixed vocabulary, computed ONCE (tiled Pallas matmul)
        # instead of 13 tiny M=1 pallas_linear calls per forward.
        self.class_text_embeddings = pallas_linear(self.text_table, self.align_w, self.align_b)

        # trilinear-interpolation matrices (feat -> roi), align_corners=False
        wd = _linear_interp_matrix(fd, self.roi_size[0])
        wh = _linear_interp_matrix(fh, self.roi_size[1])
        ww = _linear_interp_matrix(fw, self.roi_size[2])
        self.interp_wd = jnp.asarray(wd)                       # (Dout, Din)
        self.interp_whwT = jnp.asarray(np.kron(wh, ww).T)      # (Hin*Win, Hout*Wout)

        self.predifined_res = None

    # ---------------- sub-modules (synthetic stand-ins) ----------------

    def image_encoder(self, image):
        # TODO(synk): ViT transformer blocks of the real image encoder are an external
        # checkpoint; only the patch-embedding + positional-embedding front end is kept.
        bs, cin, D, H, W = image.shape
        pd_, ph, pw = self.patch_size
        fd, fh, fw = self._feat
        x = image.reshape(bs, cin, fd, pd_, fh, ph, fw, pw)
        x = jnp.transpose(x, (0, 2, 4, 6, 1, 3, 5, 7))
        x = x.reshape(bs * fd * fh * fw, cin * pd_ * ph * pw)          # (bs*N, patch_dim)
        emb = pallas_linear(x, self.patch_w, self.patch_b)             # tiled bf16 MXU matmul
        emb = emb.reshape(bs, fd * fh * fw, self.EMBED_DIM) + self.pos_embed[None]
        return emb, None

    def text_encoder(self, text):
        if text is None:
            return None
        if isinstance(text, str):
            text = [text]
        # TODO(synk): tokenizer + CLIPTextModel replaced by a deterministic embedding lookup;
        # dim_align was applied to the whole vocabulary once at __init__ (Pallas).
        idx = jnp.asarray([self.vocab.get(t, 0) for t in text], jnp.int32)
        return self.class_text_embeddings[idx]                         # (n, 768)

    def prompt_encoder(self, points, boxes, masks, text_embedding):
        fd, fh, fw = self._feat
        if text_embedding is not None:
            sparse = text_embedding[:, None, :]                        # (n, 1, 768)
        else:
            sparse = jnp.zeros((1, 0, self.EMBED_DIM), jnp.float32)
        dense = jnp.broadcast_to(
            self.no_mask_embed.reshape(1, self.EMBED_DIM, 1, 1, 1),
            (1, self.EMBED_DIM, fd, fh, fw))
        return sparse, dense

    def get_dense_pe(self):
        return self.dense_pe

    def mask_decoder(self, image_embeddings, text_embedding, image_pe,
                     sparse_prompt_embeddings, dense_prompt_embeddings,
                     multimask_output=False):
        # TODO(synk): SAM two-way transformer mask decoder replaced by a per-voxel dot
        # product between prompt tokens and the (feature + PE + dense) map, batched over
        # ALL prompt tokens/classes in a single lane-dense Pallas matmul per batch row.
        bs = image_embeddings.shape[0]
        fd, fh, fw = self._feat
        n_vox = fd * fh * fw
        emb_cf = image_embeddings.reshape(bs, self.EMBED_DIM, n_vox)   # channel-first
        pd = (image_pe + dense_prompt_embeddings)[0].reshape(self.EMBED_DIM, n_vox)
        scale = 1.0 / float(np.sqrt(self.EMBED_DIM))
        return pallas_decoder_scores(text_embedding, emb_cf, pd, scale)  # (bs, n_tok, n_vox)

    # ---------------- shared low-res decode ----------------

    def _low_res_masks(self, image_embedding, text, boxes=None, points=None):
        text_embedding = self.text_encoder(text) if text is not None else None
        sparse_embeddings, dense_embeddings = self.prompt_encoder(
            points=points, boxes=boxes, masks=None, text_embedding=text_embedding)
        dense_pe = self.get_dense_pe()
        return self.mask_decoder(
            image_embeddings=image_embedding, text_embedding=text_embedding,
            image_pe=dense_pe, sparse_prompt_embeddings=sparse_embeddings,
            dense_prompt_embeddings=dense_embeddings, multimask_output=False)

    # ---------------- SegVol.forward_decoder ----------------

    def forward_decoder(self, image_embedding, img_shape, text=None, boxes=None, points=None):
        if boxes is not None and boxes.ndim == 2:
            boxes = boxes[:, None, :]
        low = self._low_res_masks(image_embedding, text, boxes, points)  # (bs, 1, n_vox)
        bs = low.shape[0]
        fd, fh, fw = self._feat
        low2d = low.reshape(bs, fd, fh * fw)
        # F.interpolate(..., size=img_shape, mode='trilinear', align_corners=False)
        up = pallas_trilinear_upsample(low2d, self.interp_wd, self.interp_whwT)
        return up.reshape(bs, 1, img_shape[0], img_shape[1], img_shape[2])

    # ---------------- SegVol.forward ----------------

    def forward(self, image, text=None, boxes=None, points=None, **kwargs):
        bs = image.shape[0]
        img_shape = (image.shape[2], image.shape[3], image.shape[4])
        image_embedding, _ = self.image_encoder(image)                 # (bs, N, 768)
        fd, fh, fw = self._feat
        image_embedding = jnp.transpose(image_embedding, (0, 2, 1)).reshape(
            bs, -1, fd, fh, fw)                                        # channel-first, once

        # All 13 predefined classes in ONE decoder call (lane-dense (13, n_vox) scores
        # per batch row), then ONE fused upsample+argmax kernel: the full-resolution
        # per-class logits are never materialized in HBM.
        n_cls = len(PREDEFINED_CATEGORIES)
        low_all = self._low_res_masks(image_embedding, list(PREDEFINED_CATEGORIES))
        low_all = low_all.reshape(bs, n_cls, fd, fh * fw)
        res = pallas_upsample_argmax(low_all, self.interp_wd, self.interp_whwT)
        res = res.reshape(bs, img_shape[0], img_shape[1], img_shape[2])
        self.predifined_res = res[0] if bs == 1 else res               # mirror torch .squeeze()

        if self.test_mode:
            target_logits = self.forward_decoder(image_embedding, img_shape, text, boxes, points)
            return target_logits
        return None


# ----------------------------------------------------------------------------
# Demo
# ----------------------------------------------------------------------------

if __name__ == "__main__":
    key = jax.random.PRNGKey(0)
    bs = 2
    roi_size = (32, 32, 32)
    patch_size = (8, 8, 8)
    image = jax.random.normal(key, (bs, 1) + roi_size, jnp.float32)

    model = SegVolPallas(roi_size=roi_size, patch_size=patch_size, test_mode=True)
    target_logits = model.forward(image, text='liver')

    jax.block_until_ready(target_logits)
    jax.block_until_ready(model.predifined_res)

    assert target_logits.shape == (bs, 1, 32, 32, 32)
    assert model.predifined_res.shape == (bs, 32, 32, 32)
    assert model.predifined_res.dtype == jnp.int32
    print("KERNEL_OK")
</pallas_src>

<mosaic_0001>
module attributes {stable_mosaic.version = 11 : i64} {
  func.func @_linear_kernel(%arg0: i32, %arg1: i32, %arg2: i32, %arg3: memref<16x256xbf16, #tpu.memory_space<vmem>>, %arg4: memref<256x256xbf16, #tpu.memory_space<vmem>>, %arg5: memref<1x256xf32, #tpu.memory_space<vmem>>, %arg6: memref<16x256xf32, #tpu.memory_space<vmem>>, %arg7: memref<16x256xf32, #tpu.memory_space<vmem>>) attributes {dimension_semantics = [#tpu.dimension_semantics<parallel>, #tpu.dimension_semantics<parallel>, #tpu.dimension_semantics<arbitrary>], iteration_bounds = array<i64: 1, 3, 2>, scalar_prefetch = 0 : i64, scratch_operands = 1 : i64, tpu.core_type = #tpu.core_type<tc>, window_params = [{transform_indices = @transform_0, window_bounds = array<i64: 16, 256>}, {transform_indices = @transform_1, window_bounds = array<i64: 256, 256>}, {transform_indices = @transform_2, window_bounds = array<i64: 1, 256>}, {transform_indices = @transform_3, window_bounds = array<i64: 16, 256>}]} {
    %c0_i32 = arith.constant 0 : i32
    %0 = arith.cmpi eq, %arg2, %c0_i32 : i32
    %1 = arith.extui %0 : i1 to i32
    %c0_i32_0 = arith.constant 0 : i32
    %2 = arith.cmpi ne, %1, %c0_i32_0 : i32
    scf.if %2 {
      %cst_9 = arith.constant 0.000000e+00 : f32
      %12 = vector.broadcast %cst_9 : f32 to vector<16x256xf32>
      %c0_10 = arith.constant 0 : index
      %c0_11 = arith.constant 0 : index
      %13 = vector.load %arg7[%c0_10, %c0_11] : memref<16x256xf32, #tpu.memory_space<vmem>>, vector<16x256xf32>
      tpu.vector_store %arg7[%c0_10, %c0_11], %12 {strides = array<i32>} : memref<16x256xf32, #tpu.memory_space<vmem>>, vector<16x256xf32>,
    } else {
    }
    %c0 = arith.constant 0 : index
    %c0_1 = arith.constant 0 : index
    %3 = vector.load %arg7[%c0, %c0_1] : memref<16x256xf32, #tpu.memory_space<vmem>>, vector<16x256xf32>
    %c0_2 = arith.constant 0 : index
    %c0_3 = arith.constant 0 : index
    %4 = vector.load %arg3[%c0_2, %c0_3] : memref<16x256xbf16, #tpu.memory_space<vmem>>, vector<16x256xbf16>
    %c0_4 = arith.constant 0 : index
    %c0_5 = arith.constant 0 : index
    %5 = vector.load %arg4[%c0_4, %c0_5] : memref<256x256xbf16, #tpu.memory_space<vmem>>, vector<256x256xbf16>
    %cst = arith.constant dense<0.000000e+00> : vector<16x256xf32>
    %6 = tpu.matmul %4, %5, %cst {dimension_numbers = #tpu.dot_dimension_numbers<[1], [0], [0], [1], [0, 0, 1, 1], [], []>} : vector<16x256xbf16>, vector<256x256xbf16>, vector<16x256xf32> -> vector<16x256xf32>
    %7 = arith.addf %3, %6 : vector<16x256xf32>
    %c0_6 = arith.constant 0 : index
    %c0_7 = arith.constant 0 : index
    %8 = vector.load %arg7[%c0_6, %c0_7] : memref<16x256xf32, #tpu.memory_space<vmem>>, vector<16x256xf32>
    tpu.vector_store %arg7[%c0_6, %c0_7], %7 {strides = array<i32>} : memref<16x256xf32, #tpu.memory_space<vmem>>, vector<16x256xf32>,
    %c1_i32 = arith.constant 1 : i32
    %9 = arith.cmpi eq, %arg2, %c1_i32 : i32
    %10 = arith.extui %9 : i1 to i32
    %c0_i32_8 = arith.constant 0 : i32
    %11 = arith.cmpi ne, %10, %c0_i32_8 : i32
    scf.if %11 {
      %c0_9 = arith.constant 0 : index
      %c0_10 = arith.constant 0 : index
      %12 = vector.load %arg7[%c0_9, %c0_10] : memref<16x256xf32, #tpu.memory_space<vmem>>, vector<16x256xf32>
      %c0_11 = arith.constant 0 : index
      %c0_12 = arith.constant 0 : index
      %13 = vector.load %arg5[%c0_11, %c0_12] : memref<1x256xf32, #tpu.memory_space<vmem>>, vector<1x256xf32>
      %14 = vector.broadcast %13 : vector<1x256xf32> to vector<16x256xf32>
      %15 = arith.addf %12, %14 : vector<16x256xf32>
      %c0_13 = arith.constant 0 : index
      %c0_14 = arith.constant 0 : index
      %16 = vector.load %arg6[%c0_13, %c0_14] : memref<16x256xf32, #tpu.memory_space<vmem>>, vector<16x256xf32>
      tpu.vector_store %arg6[%c0_13, %c0_14], %15 {strides = array<i32>} : memref<16x256xf32, #tpu.memory_space<vmem>>, vector<16x256xf32>,
    } else {
    }
    return
  }
  func.func @transform_0(%arg0: i32, %arg1: i32, %arg2: i32) -> (i32, i32) {
    %c0_i32 = arith.constant 0 : i32
    return %arg0, %arg2 : i32, i32
  }
  func.func @transform_1(%arg0: i32, %arg1: i32, %arg2: i32) -> (i32, i32) {
    %c0_i32 = arith.constant 0 : i32
    return %arg2, %arg1 : i32, i32
  }
  func.func @transform_2(%arg0: i32, %arg1: i32, %arg2: i32) -> (i32, i32) {
    %c0_i32 = arith.constant 0 : i32
    %c0_i32_0 = arith.constant 0 : i32
    return %c0_i32, %arg1 : i32, i32
  }
  func.func @transform_3(%arg0: i32, %arg1: i32, %arg2: i32) -> (i32, i32) {
    %c0_i32 = arith.constant 0 : i32
    return %arg0, %arg1 : i32, i32
  }
}

</mosaic_0001>

<llo_original>
// kernel: tpu_custom_call.1
$region0: #{tpu_custom_call.1}
  #allocation0 [shape = 'u32[]', space=smem, size = 0x4, offset = 0x4, fixed_abs, tag = 'smem constant byte address 0x4 - core index']
  #allocation1 [shape = 'u32[72,128]{1,0:T(1,128)}', space=vmem, size = 0x9000, scoped, tag = 'internal scratch']
  #allocation2 [shape = 'f32[16,256]{1,0:T(8,128)}', space=vmem, size = 0x4000, scoped, tag = 'scratch operand']
  %s0 = inlined_call_operand.hbm [shape: bf16[16,512], index: 0, kind: input, shape index: {}]
  %s1 = inlined_call_operand.hbm [shape: bf16[512,768], index: 1, kind: input, shape index: {}]
  %s2 = inlined_call_operand.hbm [shape: f32[1,768], index: 2, kind: input, shape index: {}]
  %s3 = inlined_call_operand.hbm [shape: f32[16,768], index: 3, kind: output, shape index: {}]
  %s4 = sld [smem:[#allocation0]]
  $region65: #{tpu_custom_call.1} parent=0
    _
  %s6 = ssub.s32 1, %s4
  %s7 = scalar_select 0, %s6, %s4
  $region1: #{tpu_custom_call.1} parent=0
    #allocation3 [shape = 'u8[16384]{0}', space=vmem, size = 0x4000, scoped, tag = 'input window, operand 0']
    #allocation4 [shape = 's32[2]{0}', space=sflag, size = 0x8, scoped, tag = 'scoped memory for tpu_custom_call.1']
    #allocation5 [shape = 's32[2]{0}', space=sflag, size = 0x8, scoped, tag = 'scoped memory for tpu_custom_call.1']
    #allocation6 [shape = 'u8[262144]{0}', space=vmem, size = 0x40000, scoped, tag = 'input window, operand 1']
    #allocation7 [shape = 's32[2]{0}', space=sflag, size = 0x8, scoped, tag = 'scoped memory for tpu_custom_call.1']
    #allocation8 [shape = 'u8[2048]{0}', space=vmem, size = 0x800, scoped, tag = 'input window, operand 2']
    #allocation9 [shape = 'u8[32768]{0}', space=vmem, size = 0x8000, scoped, tag = 'output window, operand 0']
    %8 = vsyncpa [#allocation4], 0
    %s9 = scalar_lea.sflag [#allocation4], 1
    %10 = vsyncpa %s9, 0
    %11 = vsyncpa [#allocation7], 0
    %s12 = scalar_lea.sflag [#allocation7], 1
    %13 = vsyncpa %s12, 0
    %14 = vsyncpa [#allocation5], 0
    %s15 = scalar_lea.sflag [#allocation5], 1
    %16 = vsyncpa %s15, 0
    loop: start=0, step=1, limit=8
    $region2: #{tpu_custom_call.1} parent=1 // loop_pre_header
      _
    $region3: #{tpu_custom_call.1} parent=1 // loop_header
      %s18 = sphi 0, %s22
      %p19 = scmp.ge.s32.totalorder %s18, 8
      %s25 = sphi 0, %s44
      %s26 = sphi 0, %s40
      %s27 = sphi 0, %s36
      %s28 = sphi 0, %s25
      %s29 = sphi 0, %s26
      %s30 = sphi 0, %s27
      %s31 = sphi 0, %s28
      %s32 = sphi 0, %s29
      %s33 = sphi 0, %s30
      %s49 = sphi 0, %s51
      %s52 = sphi 0, %s49
      %s53 = sphi 0, %s52
      %s69 = sphi 0, %s53
      %s77 = sphi 0, %s79
      %s80 = sphi 0, %s77
      %s81 = sphi 0, %s80
      %s97 = sphi 0, %s81
      %s103 = sphi 0, %s105
      %s106 = sphi 0, %s103
      %s107 = sphi 0, %s106
      %s123 = sphi 0, %s107
      %s131 = sphi 0, %s133
      %s134 = sphi 0, %s131
      %s135 = sphi 0, %s134
      %s151 = sphi 0, %s135
    $region4: #{tpu_custom_call.1} parent=1 // loop_header_branch
      %21 = sbr.rel (%p19) target = $region8
    $region5: #{tpu_custom_call.1} parent=1 // loop_body
      %s23 = ssub.s32 %s18, 1
      %s24 = ssub.s32 %s18, 2
      %s34 = sadd.s32 1, %s27
      %p35 = scmp.ge.s32.totalorder %s34, 2
      %s36 = scalar_select %p35, 0, %s34
      %s37 = sadd.s32 1, %s26
      %s38 = scalar_select %p35, %s37, %s26
      %p39 = scmp.ge.s32.totalorder %s38, 3
      %s40 = scalar_select %p39, 0, %s38
      %s41 = sadd.s32 1, %s25
      %s42 = scalar_select %p39, %s41, %s25
      %p43 = scmp.ge.s32.totalorder %s42, 1
      %s44 = scalar_select %p43, 0, %s42
      %s45 = ssub.s32 %s25, %s44
      %s46 = ssub.s32 %s27, %s36
      %s47 = sor.u32 %s45, %s46
      %p48 = scmp.eq.s32.totalorder %s47, 0
      %s50 = sadd.s32 %s49, 1
      %s51 = scalar_select %p48, %s49, %s50
      %p54 = pneg %p48
      %p55 = scmp.eq.s32.totalorder %s18, 5
      %p56 = por %p54, %p55
      %p57 = scmp.ne.s32.totalorder %s49, %s52
      %p58 = scmp.eq.s32.totalorder %s18, 0
      %p59 = por %p57, %p58
      %p60 = scmp.ne.s32.totalorder %s49, %s52
      %p61 = scmp.eq.s32.totalorder %s23, 5
      %p62 = por %p60, %p61
      %p63 = scmp.ne.s32.totalorder %s52, %s53
      %p64 = scmp.eq.s32.totalorder %s23, 0
      %p65 = por %p63, %p64
      %p66 = scmp.ne.s32.totalorder %s52, %s53
      %p67 = scmp.eq.s32.totalorder %s24, 5
      %p68 = por %p66, %p67
      %p70 = scmp.ne.s32.totalorder %s53, %s69
      %p71 = scmp.eq.s32.totalorder %s24, 0
      %p72 = por %p70, %p71
      %s73 = ssub.s32 %s27, %s36
      %s74 = ssub.s32 %s26, %s40
      %s75 = sor.u32 %s73, %s74
      %p76 = scmp.eq.s32.totalorder %s75, 0
      %s78 = sadd.s32 %s77, 1
      %s79 = scalar_select %p76, %s77, %s78
      %p82 = pneg %p76
      %p83 = scmp.eq.s32.totalorder %s18, 5
      %p84 = por %p82, %p83
      %p85 = scmp.ne.s32.totalorder %s77, %s80
      %p86 = scmp.eq.s32.totalorder %s18, 0
      %p87 = por %p85, %p86
      %p88 = scmp.ne.s32.totalorder %s77, %s80
      %p89 = scmp.eq.s32.totalorder %s23, 5
      %p90 = por %p88, %p89
      %p91 = scmp.ne.s32.totalorder %s80, %s81
      %p92 = scmp.eq.s32.totalorder %s23, 0
      %p93 = por %p91, %p92
      %p94 = scmp.ne.s32.totalorder %s80, %s81
      %p95 = scmp.eq.s32.totalorder %s24, 5
      %p96 = por %p94, %p95
      %p98 = scmp.ne.s32.totalorder %s81, %s97
      %p99 = scmp.eq.s32.totalorder %s24, 0
      %p100 = por %p98, %p99
      %s101 = ssub.s32 %s26, %s40
      %p102 = scmp.eq.s32.totalorder %s101, 0
      %s104 = sadd.s32 %s103, 1
      %s105 = scalar_select %p102, %s103, %s104
      %p108 = pneg %p102
      %p109 = scmp.eq.s32.totalorder %s18, 5
      %p110 = por %p108, %p109
      %p111 = scmp.ne.s32.totalorder %s103, %s106
      %p112 = scmp.eq.s32.totalorder %s18, 0
      %p113 = por %p111, %p112
      %p114 = scmp.ne.s32.totalorder %s103, %s106
      %p115 = scmp.eq.s32.totalorder %s23, 5
      %p116 = por %p114, %p115
      %p117 = scmp.ne.s32.totalorder %s106, %s107
      %p118 = scmp.eq.s32.totalorder %s23, 0
      %p119 = por %p117, %p118
      %p120 = scmp.ne.s32.totalorder %s106, %s107
      %p121 = scmp.eq.s32.totalorder %s24, 5
      %p122 = por %p120, %p121
      %p124 = scmp.ne.s32.totalorder %s107, %s123
      %p125 = scmp.eq.s32.totalorder %s24, 0
      %p126 = por %p124, %p125
      %s127 = ssub.s32 %s25, %s44
      %s128 = ssub.s32 %s26, %s40
      %s129 = sor.u32 %s127, %s128
      %p130 = scmp.eq.s32.totalorder %s129, 0
      %s132 = sadd.s32 %s131, 1
      %s133 = scalar_select %p130, %s131, %s132
      %p136 = pneg %p130
      %p137 = scmp.eq.s32.totalorder %s18, 5
      %p138 = por %p136, %p137
      %p139 = scmp.ne.s32.totalorder %s131, %s134
      %p140 = scmp.eq.s32.totalorder %s18, 0
      %p141 = por %p139, %p140
      %p142 = scmp.ne.s32.totalorder %s131, %s134
      %p143 = scmp.eq.s32.totalorder %s23, 5
      %p144 = por %p142, %p143
      %p145 = scmp.ne.s32.totalorder %s134, %s135
      %p146 = scmp.eq.s32.totalorder %s23, 0
      %p147 = por %p145, %p146
      %p148 = scmp.ne.s32.totalorder %s134, %s135
      %p149 = scmp.eq.s32.totalorder %s24, 5
      %p150 = por %p148, %p149
      %p152 = scmp.ne.s32.totalorder %s135, %s151
      %p153 = scmp.eq.s32.totalorder %s24, 0
      %p154 = por %p152, %p153
      %p155 = scmp.le.s32.totalorder 1, %s18
      %p156 = scmp.lt.s32.totalorder %s18, 7
      %p157 = pnand %p155, %p156
      %p158 = pneg %p157
      // Predicated region
      $region9: #{tpu_custom_call.1} parent=5 // pred_check
        _
      $region10: #{tpu_custom_call.1} parent=5 // pred_check_branch
        %160 = sbr.rel (%p157) target = $region12
      $region11: #{tpu_custom_call.1} parent=5 // pred_region
        %s161 = ssub.s32 %s18, 1
      $region12: #{tpu_custom_call.1} parent=5 // pred_fallthru
        _
      %p162 = scmp.lt.s32.totalorder %s18, 6
      // Predicated region
      $region13: #{tpu_custom_call.1} parent=5 // pred_check
        %p163 = pneg %p162
      $region14: #{tpu_custom_call.1} parent=5 // pred_check_branch
        %165 = sbr.rel (%p163) target = $region16
      $region15: #{tpu_custom_call.1} parent=5 // pred_region
        // Predicated region
        $region17: #{tpu_custom_call.1} parent=15 // pred_check
          %p166 = pneg %p59
        $region18: #{tpu_custom_call.1} parent=15 // pred_check_branch
          %168 = sbr.rel (%p166) target = $region20
        $region19: #{tpu_custom_call.1} parent=15 // pred_region
          %s169 = sand.u32 %s49, 1
          %s170 = scalar_lea.sflag [#allocation4], %s169
          %s171 = sand.u32 %s49, 1
          %s172 = smul.addr %s171, 16
          %s173 = scalar_lea.vmem [#allocation3], %s172
          %s174 = smul.u32 2, %s25
          %s175 = smul.u32 2, %s27
          %177 = vsyncadd %s170, 0
          %s178 = smul.addr %s174, 4
          %s179 = sadd.s32 %s175, %s178
          %s180 = smul.addr %s179, 4
          %s181 = scalar_lea.hbm %s0, %s180
          %s182 = sshll.u32 %s181, 4
          %s183 = int_to_ptr.hbm [resolvable:$true] %s182
          %s184 = sshll.u32 %s173, 4
          %s185 = int_to_ptr.vmem [resolvable:$true] %s184
          %190 = dma.hbm_to_vmem [thread:$0]  %s183, 256, %s185, %s170, 256, 128, 8
        $region20: #{tpu_custom_call.1} parent=15 // pred_fallthru
          _
        // Predicated region
        $region21: #{tpu_custom_call.1} parent=15 // pred_check
          %p191 = pneg %p87
        $region22: #{tpu_custom_call.1} parent=15 // pred_check_branch
          %193 = sbr.rel (%p191) target = $region24
        $region23: #{tpu_custom_call.1} parent=15 // pred_region
          %s194 = sand.u32 %s18, 1
          %s195 = scalar_lea.sflag [#allocation7], %s194
          %s196 = sand.u32 %s77, 1
          %s197 = smul.addr %s196, 256
          %s198 = scalar_lea.vmem [#allocation6], %s197
          %s199 = smul.u32 32, %s27
          %s200 = smul.u32 2, %s26
          %202 = vsyncadd %s195, 0
          %s203 = smul.addr %s199, 6
          %s204 = sadd.s32 %s200, %s203
          %s205 = smul.addr %s204, 4
          %s206 = scalar_lea.hbm %s1, %s205
          %s207 = sshll.u32 %s206, 4
          %s208 = int_to_ptr.hbm [resolvable:$true] %s207
          %s209 = sshll.u32 %s198, 4
          %s210 = int_to_ptr.vmem [resolvable:$true] %s209
          %215 = dma.hbm_to_vmem [thread:$0]  %s208, 4096, %s210, %s195, 384, 128, 8
        $region24: #{tpu_custom_call.1} parent=15 // pred_fallthru
          _
        // Predicated region
        $region25: #{tpu_custom_call.1} parent=15 // pred_check
          %p216 = pneg %p113
        $region26: #{tpu_custom_call.1} parent=15 // pred_check_branch
          %218 = sbr.rel (%p216) target = $region28
        $region27: #{tpu_custom_call.1} parent=15 // pred_region
          %s219 = sand.u32 %s18, 1
          %s220 = scalar_lea.sflag [#allocation7], %s219
          %s221 = sand.u32 %s103, 1
          %s222 = smul.addr %s221, 2
          %s223 = scalar_lea.vmem [#allocation8], %s222
          %s224 = smul.u32 2, %s26
          %226 = vsyncadd %s220, 0
          %s227 = scalar_lea.hbm %s2, %s224
          %s229 = sshll.u32 %s227, 4
          %s230 = int_to_ptr.hbm [resolvable:$true] %s229
          %s231 = sshll.u32 %s223, 4
          %s232 = int_to_ptr.vmem [resolvable:$true] %s231
          %234 = dma.hbm_to_vmem [thread:$0]  %s230, 32, %s232, %s220
        $region28: #{tpu_custom_call.1} parent=15 // pred_fallthru
          _
      $region16: #{tpu_custom_call.1} parent=5 // pred_fallthru
        _
      %p235 = scmp.le.s32.totalorder 1, %s18
      %p236 = scmp.lt.s32.totalorder %s18, 7
      %p237 = pnand %p235, %p236
      %p238 = pneg %p237
      // Predicated region
      $region29: #{tpu_custom_call.1} parent=5 // pred_check
        _
      $region30: #{tpu_custom_call.1} parent=5 // pred_check_branch
        %240 = sbr.rel (%p237) target = $region32
      $region31: #{tpu_custom_call.1} parent=5 // pred_region
        %s241 = ssub.s32 %s18, 1
        %s242 = sand.u32 %s52, 1
        %s243 = scalar_lea.sflag [#allocation4], %s242
        %s244 = sand.u32 %s52, 1
        %s245 = smul.addr %s244, 16
        %s246 = scalar_lea.vmem [#allocation3], %s245
        // Predicated region
        $region33: #{tpu_custom_call.1} parent=31 // pred_check
          %p247 = pneg %p65
        $region34: #{tpu_custom_call.1} parent=31 // pred_check_branch
          %249 = sbr.rel (%p247) target = $region36
        $region35: #{tpu_custom_call.1} parent=31 // pred_region
          %251 = dma.done %s243, 256
        $region36: #{tpu_custom_call.1} parent=31 // pred_fallthru
          _
        %s252 = sand.u32 %s23, 1
        %s253 = scalar_lea.sflag [#allocation7], %s252
        %s254 = sand.u32 %s80, 1
        %s255 = smul.addr %s254, 256
        %s256 = scalar_lea.vmem [#allocation6], %s255
        // Predicated region
        $region37: #{tpu_custom_call.1} parent=31 // pred_check
          %p257 = pneg %p93
        $region38: #{tpu_custom_call.1} parent=31 // pred_check_branch
          %259 = sbr.rel (%p257) target = $region40
        $region39: #{tpu_custom_call.1} parent=31 // pred_region
          %261 = dma.done %s253, 4096
        $region40: #{tpu_custom_call.1} parent=31 // pred_fallthru
          _
        %s262 = sand.u32 %s23, 1
        %s263 = scalar_lea.sflag [#allocation7], %s262
        %s264 = sand.u32 %s106, 1
        %s265 = smul.addr %s264, 2
        %s266 = scalar_lea.vmem [#allocation8], %s265
        // Predicated region
        $region41: #{tpu_custom_call.1} parent=31 // pred_check
          %p267 = pneg %p119
        $region42: #{tpu_custom_call.1} parent=31 // pred_check_branch
          %269 = sbr.rel (%p267) target = $region44
        $region43: #{tpu_custom_call.1} parent=31 // pred_region
          %271 = dma.done %s263, 32
        $region44: #{tpu_custom_call.1} parent=31 // pred_fallthru
          _
        %s272 = sand.u32 %s52, 1
        %s273 = scalar_lea.sflag [#allocation4], %s272
        %s274 = sand.u32 %s52, 1
        %s275 = smul.addr %s274, 16
        %s276 = scalar_lea.vmem [#allocation3], %s275
        %p277 = pneg %p65
        %p278 = pneg %p62
        %s279 = sand.u32 %s23, 1
        %s280 = scalar_lea.sflag [#allocation7], %s279
        %s281 = sand.u32 %s80, 1
        %s282 = smul.addr %s281, 256
        %s283 = scalar_lea.vmem [#allocation6], %s282
        %p284 = pneg %p93
        %p285 = pneg %p90
        %s286 = sand.u32 %s23, 1
        %s287 = scalar_lea.sflag [#allocation7], %s286
        %s288 = sand.u32 %s106, 1
        %s289 = smul.addr %s288, 2
        %s290 = scalar_lea.vmem [#allocation8], %s289
        %p291 = pneg %p119
        %p292 = pneg %p116
        %p293 = pneg %p147
        %p294 = pneg %p144
        %s295 = sand.u32 %s134, 1
        %s296 = scalar_lea.sflag [#allocation5], %s295
        %s297 = sand.u32 %s134, 1
        %s298 = smul.addr %s297, 32
        %s299 = scalar_lea.vmem [#allocation9], %s298
        %s300 = smul.u32 2, %s28
        %s301 = smul.u32 2, %s30
        %s302 = smul.u32 32, %s30
        %s303 = smul.u32 2, %s29
        %s304 = smul.u32 2, %s29
        %s305 = smul.u32 2, %s28
        %s306 = smul.u32 2, %s29
        %p307 = scmp.eq.s32.totalorder %s30, 0
        // Predicated region
        $region45: #{tpu_custom_call.1} parent=31 // pred_check
          %p308 = pneg %p307
        $region46: #{tpu_custom_call.1} parent=31 // pred_check_branch
          %310 = sbr.rel (%p308) target = $region48
        $region47: #{tpu_custom_call.1} parent=31 // pred_region
          %311 = vst [vmem:[#allocation2] sm:$0xff] 0.0
          %312 = vst [vmem:[#allocation2 + $0x8] sm:$0xff] 0.0
          %313 = vst [vmem:[#allocation2 + $0x10] sm:$0xff] 0.0
          %314 = vst [vmem:[#allocation2 + $0x18] sm:$0xff] 0.0
        $region48: #{tpu_custom_call.1} parent=31 // pred_fallthru
          _
        %v315 = vld [vmem:[#allocation2] sm:$0xff]
        %v316 = vld [vmem:[#allocation2 + $0x8] sm:$0xff]
        %v317 = vld [vmem:[#allocation2 + $0x10] sm:$0xff]
        %v318 = vld [vmem:[#allocation2 + $0x18] sm:$0xff]
        %v319 = vld [vmem:[%s246] sm:$0xff]
        %v320 = vld [vmem:[%s246 + $0x8] sm:$0xff]
        %v321 = vld [vmem:[%s256] sm:$0xff]
        %v322 = vld [vmem:[%s256 + $0x8] sm:$0xff]
        %v323 = vld [vmem:[%s256 + $0x10] sm:$0xff]
        %v324 = vld [vmem:[%s256 + $0x18] sm:$0xff]
        %v325 = vld [vmem:[%s256 + $0x20] sm:$0xff]
        %v326 = vld [vmem:[%s256 + $0x28] sm:$0xff]
        %v327 = vld [vmem:[%s256 + $0x30] sm:$0xff]
        %v328 = vld [vmem:[%s256 + $0x38] sm:$0xff]
        %v329 = vld [vmem:[%s256 + $0x40] sm:$0xff]
        %v330 = vld [vmem:[%s256 + $0x48] sm:$0xff]
        %v331 = vld [vmem:[%s256 + $0x50] sm:$0xff]
        %v332 = vld [vmem:[%s256 + $0x58] sm:$0xff]
        %v333 = vld [vmem:[%s256 + $0x60] sm:$0xff]
        %v334 = vld [vmem:[%s256 + $0x68] sm:$0xff]
        %v335 = vld [vmem:[%s256 + $0x70] sm:$0xff]
        %v336 = vld [vmem:[%s256 + $0x78] sm:$0xff]
        %v337 = vld [vmem:[%s256 + $0x80] sm:$0xff]
        %v338 = vld [vmem:[%s256 + $0x88] sm:$0xff]
        %v339 = vld [vmem:[%s256 + $0x90] sm:$0xff]
        %v340 = vld [vmem:[%s256 + $0x98] sm:$0xff]
        %v341 = vld [vmem:[%s256 + $0xa0] sm:$0xff]
        %v342 = vld [vmem:[%s256 + $0xa8] sm:$0xff]
        %v343 = vld [vmem:[%s256 + $0xb0] sm:$0xff]
        %v344 = vld [vmem:[%s256 + $0xb8] sm:$0xff]
        %v345 = vld [vmem:[%s256 + $0xc0] sm:$0xff]
        %v346 = vld [vmem:[%s256 + $0xc8] sm:$0xff]
        %v347 = vld [vmem:[%s256 + $0xd0] sm:$0xff]
        %v348 = vld [vmem:[%s256 + $0xd8] sm:$0xff]
        %v349 = vld [vmem:[%s256 + $0xe0] sm:$0xff]
        %v350 = vld [vmem:[%s256 + $0xe8] sm:$0xff]
        %v351 = vld [vmem:[%s256 + $0xf0] sm:$0xff]
        %v352 = vld [vmem:[%s256 + $0xf8] sm:$0xff]
        %v355 = vunpack.c.l.b16 %v319
        %v356 = vunpack.c.h.b16 %v319
        %v357 = vunpack.c.l.b16 %v320
        %v358 = vunpack.c.h.b16 %v320
        %v359 = vpack.c.b16 %v357, %v355
        %v360 = vpack.c.b16 %v358, %v356
        %v395 = vunpack.c.l.b16 %v321
        %v396 = vunpack.c.h.b16 %v321
        %v397 = vunpack.c.l.b16 %v322
        %v398 = vunpack.c.h.b16 %v322
        %v399 = vunpack.c.l.b16 %v323
        %v400 = vunpack.c.h.b16 %v323
        %v401 = vunpack.c.l.b16 %v324
        %v402 = vunpack.c.h.b16 %v324
        %v403 = vunpack.c.l.b16 %v325
        %v404 = vunpack.c.h.b16 %v325
        %v405 = vunpack.c.l.b16 %v326
        %v406 = vunpack.c.h.b16 %v326
        %v407 = vunpack.c.l.b16 %v327
        %v408 = vunpack.c.h.b16 %v327
        %v409 = vunpack.c.l.b16 %v328
        %v410 = vunpack.c.h.b16 %v328
        %v411 = vunpack.c.l.b16 %v329
        %v412 = vunpack.c.h.b16 %v329
        %v413 = vunpack.c.l.b16 %v330
        %v414 = vunpack.c.h.b16 %v330
        %v415 = vunpack.c.l.b16 %v331
        %v416 = vunpack.c.h.b16 %v331
        %v417 = vunpack.c.l.b16 %v332
        %v418 = vunpack.c.h.b16 %v332
        %v419 = vunpack.c.l.b16 %v333
        %v420 = vunpack.c.h.b16 %v333
        %v421 = vunpack.c.l.b16 %v334
        %v422 = vunpack.c.h.b16 %v334
        %v423 = vunpack.c.l.b16 %v335
        %v424 = vunpack.c.h.b16 %v335
        %v425 = vunpack.c.l.b16 %v336
        %v426 = vunpack.c.h.b16 %v336
        %v427 = vunpack.c.l.b16 %v337
        %v428 = vunpack.c.h.b16 %v337
        %v429 = vunpack.c.l.b16 %v338
        %v430 = vunpack.c.h.b16 %v338
        %v431 = vunpack.c.l.b16 %v339
        %v432 = vunpack.c.h.b16 %v339
        %v433 = vunpack.c.l.b16 %v340
        %v434 = vunpack.c.h.b16 %v340
        %v435 = vunpack.c.l.b16 %v341
        %v436 = vunpack.c.h.b16 %v341
        %v437 = vunpack.c.l.b16 %v342
        %v438 = vunpack.c.h.b16 %v342
        %v439 = vunpack.c.l.b16 %v343
        %v440 = vunpack.c.h.b16 %v343
        %v441 = vunpack.c.l.b16 %v344
        %v442 = vunpack.c.h.b16 %v344
        %v443 = vunpack.c.l.b16 %v345
        %v444 = vunpack.c.h.b16 %v345
        %v445 = vunpack.c.l.b16 %v346
        %v446 = vunpack.c.h.b16 %v346
        %v447 = vunpack.c.l.b16 %v347
        %v448 = vunpack.c.h.b16 %v347
        %v449 = vunpack.c.l.b16 %v348
        %v450 = vunpack.c.h.b16 %v348
        %v451 = vunpack.c.l.b16 %v349
        %v452 = vunpack.c.h.b16 %v349
        %v453 = vunpack.c.l.b16 %v350
        %v454 = vunpack.c.h.b16 %v350
        %v455 = vunpack.c.l.b16 %v351
        %v456 = vunpack.c.h.b16 %v351
        %v457 = vunpack.c.l.b16 %v352
        %v458 = vunpack.c.h.b16 %v352
        %v459 = vpack.c.b16 %v397, %v395
        %v460 = vpack.c.b16 %v398, %v396
        %v461 = vpack.c.b16 %v401, %v399
        %v462 = vpack.c.b16 %v402, %v400
        %v463 = vpack.c.b16 %v405, %v403
        %v464 = vpack.c.b16 %v406, %v404
        %v465 = vpack.c.b16 %v409, %v407
        %v466 = vpack.c.b16 %v410, %v408
        %v467 = vpack.c.b16 %v413, %v411
        %v468 = vpack.c.b16 %v414, %v412
        %v469 = vpack.c.b16 %v417, %v415
        %v470 = vpack.c.b16 %v418, %v416
        %v471 = vpack.c.b16 %v421, %v419
        %v472 = vpack.c.b16 %v422, %v420
        %v473 = vpack.c.b16 %v425, %v423
        %v474 = vpack.c.b16 %v426, %v424
        %v475 = vpack.c.b16 %v429, %v427
        %v476 = vpack.c.b16 %v430, %v428
        %v477 = vpack.c.b16 %v433, %v431
        %v478 = vpack.c.b16 %v434, %v432
        %v479 = vpack.c.b16 %v437, %v435
        %v480 = vpack.c.b16 %v438, %v436
        %v481 = vpack.c.b16 %v441, %v439
        %v482 = vpack.c.b16 %v442, %v440
        %v483 = vpack.c.b16 %v445, %v443
        %v484 = vpack.c.b16 %v446, %v444
        %v485 = vpack.c.b16 %v449, %v447
        %v486 = vpack.c.b16 %v450, %v448
        %v487 = vpack.c.b16 %v453, %v451
        %v488 = vpack.c.b16 %v454, %v452
        %v489 = vpack.c.b16 %v457, %v455
        %v490 = vpack.c.b16 %v458, %v456
        %523 = vmatpush.bf16.msra.mxu0 %v473
        %524 = vmatpush.bf16.msra.mxu0 %v471
        %525 = vmatpush.bf16.msra.mxu0 %v469
        %526 = vmatpush.bf16.msra.mxu0 %v467
        %527 = vmatpush.bf16.msra.mxu0 %v465
        %528 = vmatpush.bf16.msra.mxu0 %v463
        %529 = vmatpush.bf16.msra.mxu0 %v461
        %530 = vmatpush.bf16.msra.mxu0 %v459
        %531 = vmatmul.bf16.gmra.mxu0 %v359
        %v532 = vpop.f32.mrf.mxu0
        %v533 = vadd.f32 0.0, %v532
        %v534 = vpop.f32.mrf.mxu0
        %v535 = vadd.f32 0.0, %v534
        %536 = vdwg.mxu0
        %537 = vmatpush.bf16.msra.mxu0 %v489
        %538 = vmatpush.bf16.msra.mxu0 %v487
        %539 = vmatpush.bf16.msra.mxu0 %v485
        %540 = vmatpush.bf16.msra.mxu0 %v483
        %541 = vmatpush.bf16.msra.mxu0 %v481
        %542 = vmatpush.bf16.msra.mxu0 %v479
        %543 = vmatpush.bf16.msra.mxu0 %v477
        %544 = vmatpush.bf16.msra.mxu0 %v475
        %545 = vmatmul.bf16.gmra.mxu0 %v360
        %v546 = vpop.f32.mrf.mxu0
        %v547 = vadd.f32 %v533, %v546
        %v548 = vpop.f32.mrf.mxu0
        %v549 = vadd.f32 %v535, %v548
        %550 = vdwg.mxu0
        %551 = vmatpush.bf16.msra.mxu0 %v474
        %552 = vmatpush.bf16.msra.mxu0 %v472
        %553 = vmatpush.bf16.msra.mxu0 %v470
        %554 = vmatpush.bf16.msra.mxu0 %v468
        %555 = vmatpush.bf16.msra.mxu0 %v466
        %556 = vmatpush.bf16.msra.mxu0 %v464
        %557 = vmatpush.bf16.msra.mxu0 %v462
        %558 = vmatpush.bf16.msra.mxu0 %v460
        %559 = vmatmul.bf16.gmra.mxu0 %v359
        %v560 = vpop.f32.mrf.mxu0
        %v561 = vadd.f32 0.0, %v560
        %v562 = vpop.f32.mrf.mxu0
        %v563 = vadd.f32 0.0, %v562
        %564 = vdwg.mxu0
        %565 = vmatpush.bf16.msra.mxu0 %v490
        %566 = vmatpush.bf16.msra.mxu0 %v488
        %567 = vmatpush.bf16.msra.mxu0 %v486
        %568 = vmatpush.bf16.msra.mxu0 %v484
        %569 = vmatpush.bf16.msra.mxu0 %v482
        %570 = vmatpush.bf16.msra.mxu0 %v480
        %571 = vmatpush.bf16.msra.mxu0 %v478
        %572 = vmatpush.bf16.msra.mxu0 %v476
        %573 = vmatmul.bf16.gmra.mxu0 %v360
        %v574 = vpop.f32.mrf.mxu0
        %v575 = vadd.f32 %v561, %v574
        %v576 = vpop.f32.mrf.mxu0
        %v577 = vadd.f32 %v563, %v576
        %578 = vdwg.mxu0
        %v579 = vadd.f32 %v315, %v547
        %v580 = vadd.f32 %v316, %v575
        %v581 = vadd.f32 %v317, %v549
        %v582 = vadd.f32 %v318, %v577
        %583 = vst [vmem:[#allocation2] sm:$0xff] %v579
        %584 = vst [vmem:[#allocation2 + $0x8] sm:$0xff] %v580
        %585 = vst [vmem:[#allocation2 + $0x10] sm:$0xff] %v581
        %586 = vst [vmem:[#allocation2 + $0x18] sm:$0xff] %v582
        %p587 = scmp.eq.s32.totalorder %s30, 1
        // Predicated region
        $region49: #{tpu_custom_call.1} parent=31 // pred_check
          %p588 = pneg %p587
        $region50: #{tpu_custom_call.1} parent=31 // pred_check_branch
          %590 = sbr.rel (%p588) target = $region52
        $region51: #{tpu_custom_call.1} parent=31 // pred_region
          %v591 = vld [vmem:[#allocation2] sm:$0xff]
          %v592 = vld [vmem:[#allocation2 + $0x8] sm:$0xff]
          %v593 = vld [vmem:[#allocation2 + $0x10] sm:$0xff]
          %v594 = vld [vmem:[#allocation2 + $0x18] sm:$0xff]
          %v595 = vld [vmem:[%s266] sm:$0x3]
          %v597 = vperm.slane %v595, 0
          %v598 = vperm.slane %v595, 1
          %v601 = vadd.f32 %v591, %v597
          %v602 = vadd.f32 %v592, %v598
          %v603 = vadd.f32 %v593, %v597
          %v604 = vadd.f32 %v594, %v598
          %605 = vst [vmem:[%s299] sm:$0xff] %v601
          %606 = vst [vmem:[%s299 + $0x8] sm:$0xff] %v602
          %607 = vst [vmem:[%s299 + $0x10] sm:$0xff] %v603
          %608 = vst [vmem:[%s299 + $0x18] sm:$0xff] %v604
        $region52: #{tpu_custom_call.1} parent=31 // pred_fallthru
          _
        %s609 = sand.u32 %s134, 1
        %s610 = scalar_lea.sflag [#allocation5], %s609
        %s611 = sand.u32 %s134, 1
        %s612 = smul.addr %s611, 32
        %s613 = scalar_lea.vmem [#allocation9], %s612
        // Predicated region
        $region53: #{tpu_custom_call.1} parent=31 // pred_check
          %p614 = pneg %p144
        $region54: #{tpu_custom_call.1} parent=31 // pred_check_branch
          %616 = sbr.rel (%p614) target = $region56
        $region55: #{tpu_custom_call.1} parent=31 // pred_region
          %s617 = smul.u32 2, %s28
          %s618 = smul.u32 2, %s29
          %620 = vsyncadd %s610, 0
          %s621 = smul.addr %s617, 6
          %s622 = sadd.s32 %s618, %s621
          %s623 = smul.addr %s622, 8
          %s624 = scalar_lea.hbm %s3, %s623
          %s625 = sshll.u32 %s613, 4
          %s626 = int_to_ptr.vmem [resolvable:$true] %s625
          %s627 = sshll.u32 %s624, 4
          %s628 = int_to_ptr.hbm [resolvable:$true] %s627
          %633 = dma.vmem_to_hbm [thread:$0]  %s626, 512, %s628, %s610, 256, 768, 16
        $region56: #{tpu_custom_call.1} parent=31 // pred_fallthru
          _
      $region32: #{tpu_custom_call.1} parent=5 // pred_fallthru
        _
      %p634 = scmp.le.s32.totalorder 2, %s18
      // Predicated region
      $region57: #{tpu_custom_call.1} parent=5 // pred_check
        %p635 = pneg %p634
      $region58: #{tpu_custom_call.1} parent=5 // pred_check_branch
        %637 = sbr.rel (%p635) target = $region60
      $region59: #{tpu_custom_call.1} parent=5 // pred_region
        %s638 = ssub.s32 %s18, 2
        // Predicated region
        $region61: #{tpu_custom_call.1} parent=59 // pred_check
          %p639 = pneg %p150
        $region62: #{tpu_custom_call.1} parent=59 // pred_check_branch
          %641 = sbr.rel (%p639) target = $region64
        $region63: #{tpu_custom_call.1} parent=59 // pred_region
          %s642 = sand.u32 %s135, 1
          %s643 = scalar_lea.sflag [#allocation5], %s642
          %s644 = sand.u32 %s135, 1
          %s645 = smul.addr %s644, 32
          %s646 = scalar_lea.vmem [#allocation9], %s645
          %648 = dma.done %s643, 512
        $region64: #{tpu_custom_call.1} parent=59 // pred_fallthru
          _
      $region60: #{tpu_custom_call.1} parent=5 // pred_fallthru
        _
    $region6: #{tpu_custom_call.1} parent=1 // loop_footer
      %s22 = sadd.s32 1, %s18
    $region7: #{tpu_custom_call.1} parent=1 // loop_footer_branch
      %17 = sbr.rel target = $region3
    $region8: #{tpu_custom_call.1} parent=1 // loop_exit
      _
    %649 = vsyncpa [#allocation4], 1
    %s650 = scalar_lea.sflag [#allocation4], 1
    %651 = vsyncpa %s650, 1
    %652 = vsyncpa [#allocation7], 1
    %s653 = scalar_lea.sflag [#allocation7], 1
    %654 = vsyncpa %s653, 1
    %655 = vsyncpa [#allocation5], 1
    %s656 = scalar_lea.sflag [#allocation5], 1
    %657 = vsyncpa %s656, 1

</llo_original>
